<compile_context>
chip_gen: v5e
topology: v5e:2x2
jax: 0.10.0
libtpu: 0.0.40
codegen_flags: <defaults>
</compile_context>

<pallas_src>
import numpy as np
import jax
import jax.numpy as jnp
from jax.experimental import pallas as pl
from jax.experimental.pallas import tpu as pltpu

C_IN = 3     # module input channels
C_PAD = 8    # channel dim padded for lane / matmul-K alignment (pad lanes zero)
C_OUT = 32   # module output channels


# ----------------------------------------------------------------------------
# Fused Pallas kernel: avgpool -> depthwise 3x3 -> 1x1(+BN) -> ReLU
# ----------------------------------------------------------------------------

def _inputlayer1_kernel(x_ref, pool_ref, wdw_ref, bdw_ref, w1_ref, b1_ref,
                        o_ref, pad_ref):
    # x_ref:    (1, H, W, C_PAD)   one image, NHWC, channels zero-padded 3->8
    # pool_ref: (Hp*Wp, H*W)       constant avg-pool matrix (ceil_mode, pad=0)
    # wdw_ref:  (9, C_PAD)         depthwise 3x3 weights, tap-major (dy*3+dx)
    # bdw_ref:  (1, C_PAD)         depthwise bias (zero in padded lanes)
    # w1_ref:   (C_PAD, C_OUT)     1x1 weight with BN folded in (zero pad rows)
    # b1_ref:   (1, C_OUT)         1x1 bias with BN folded in
    # o_ref:    (1, Hp, Wp, C_OUT)
    # pad_ref:  VMEM scratch (Hp+2, Wp+2, C_PAD) -- zero halo for the 3x3 conv
    _, h, w, cpad = x_ref.shape
    _, hp, wp, cout = o_ref.shape

    # --- AvgPool2d(2, 2, ceil_mode=True): one MXU matmul ---------------------
    x2 = x_ref[0].reshape(h * w, cpad)                           # (H*W, C_PAD)
    pooled = jnp.dot(pool_ref[...], x2,
                     preferred_element_type=jnp.float32)         # (Hp*Wp, C_PAD)

    # --- depthwise 3x3, padding=1, bias (halo kept in VMEM, no HBM pad copy) -
    pad_ref[...] = jnp.zeros((hp + 2, wp + 2, cpad), jnp.float32)
    pad_ref[1:hp + 1, 1:wp + 1, :] = pooled.reshape(hp, wp, cpad)
    wdw = wdw_ref[...]                                           # (9, C_PAD)
    acc = jnp.zeros((hp, wp, cpad), jnp.float32)
    for dy in range(3):
        for dx in range(3):
            t = dy * 3 + dx
            acc = acc + pad_ref[dy:dy + hp, dx:dx + wp, :] * wdw[t:t + 1, :]
    acc = acc + bdw_ref[...]                                     # (1,C) bcast

    # --- 1x1 conv (+ folded BatchNorm) + ReLU: one lane-dense matmul ---------
    y = jnp.dot(acc.reshape(hp * wp, cpad), w1_ref[...],
                preferred_element_type=jnp.float32) + b1_ref[...]
    y = jnp.maximum(y, 0.0)
    o_ref[0] = y.reshape(hp, wp, cout).astype(o_ref.dtype)


# ----------------------------------------------------------------------------
# Wrapper-side constant prep (outside the measured path)
# ----------------------------------------------------------------------------

def _avgpool2x2_matrix(h, w):
    """Constant matrix for AvgPool2d(2, 2, ceil_mode=True), padding=0.

    Row p = ph*Wp + pw has 1/|window| at every in-bounds input pixel of its
    window (for padding=0 PyTorch divides ceil-mode edge windows by the
    in-bounds element count). For even H, W every weight is exactly 0.25.
    """
    hp, wp = -(-h // 2), -(-w // 2)
    s = np.zeros((hp * wp, h * w), np.float32)
    for ph in range(hp):
        for pw in range(wp):
            ys = range(2 * ph, min(2 * ph + 2, h))
            xs = range(2 * pw, min(2 * pw + 2, w))
            val = 1.0 / (len(ys) * len(xs))
            for yy in ys:
                for xx in xs:
                    s[ph * wp + pw, yy * w + xx] = val
    return jnp.asarray(s)


def init_params(key):
    """Deterministic init mirroring the PyTorch layers (BN at default init)."""
    ks = jax.random.split(key, 4)
    nrm = lambda k, shape, sc=0.2: (sc * jax.random.normal(k, shape)).astype(jnp.float32)
    return {
        "dw_w": nrm(ks[0], (3, 3, C_IN)),     # depthwise 3x3 weight (ky, kx, c)
        "dw_b": nrm(ks[1], (C_IN,)),          # depthwise bias
        "pw_w": nrm(ks[2], (C_IN, C_OUT)),    # 1x1 weight (cin, cout)
        "pw_b": nrm(ks[3], (C_OUT,)),         # 1x1 bias
        # BatchNorm2d(32) default init (inference mode)
        "bn_gamma": jnp.ones((C_OUT,), jnp.float32),
        "bn_beta": jnp.zeros((C_OUT,), jnp.float32),
        "bn_mean": jnp.zeros((C_OUT,), jnp.float32),
        "bn_var": jnp.ones((C_OUT,), jnp.float32),
    }


def prepare_params(params, h, w):
    """One-time packing: fold BN into the 1x1, pad channels 3 -> 8, build the
    pooling matrix.  Runs once outside the jitted forward."""
    eps = 1e-5
    scale = params["bn_gamma"] / jnp.sqrt(params["bn_var"] + eps)
    w1f = params["pw_w"] * scale[None, :]                         # (C_IN, C_OUT)
    b1f = (params["pw_b"] - params["bn_mean"]) * scale + params["bn_beta"]
    wdw = params["dw_w"].reshape(9, C_IN)                         # tap-major
    pad_c = C_PAD - C_IN
    return {
        "pool": _avgpool2x2_matrix(h, w),
        "wdw": jnp.pad(wdw, ((0, 0), (0, pad_c))),
        "bdw": jnp.pad(params["dw_b"], (0, pad_c)).reshape(1, C_PAD),
        "w1": jnp.pad(w1f, ((0, pad_c), (0, 0))),
        "b1": b1f.reshape(1, C_OUT),
    }


# ----------------------------------------------------------------------------
# Forward
# ----------------------------------------------------------------------------

def inputlayer1_forward(prep, x_nchw):
    n, c, h, w = x_nchw.shape
    assert c == C_IN, c
    hp, wp = -(-h // 2), -(-w // 2)

    # layout plumbing outside the kernel: NCHW -> NHWC, tiny channel pad 3->8
    # (fused by XLA with the transpose; the expensive spatial halo pad is
    #  handled inside the kernel in VMEM).
    x_nhwc = jnp.transpose(x_nchw, (0, 2, 3, 1))
    x_nhwc = jnp.pad(x_nhwc, ((0, 0), (0, 0), (0, 0), (0, C_PAD - c)))

    out_nhwc = pl.pallas_call(
        _inputlayer1_kernel,
        out_shape=jax.ShapeDtypeStruct((n, hp, wp, C_OUT), x_nchw.dtype),
        grid=(n,),
        in_specs=[
            pl.BlockSpec((1, h, w, C_PAD), lambda i: (i, 0, 0, 0)),
            pl.BlockSpec((hp * wp, h * w), lambda i: (0, 0)),
            pl.BlockSpec((9, C_PAD), lambda i: (0, 0)),
            pl.BlockSpec((1, C_PAD), lambda i: (0, 0)),
            pl.BlockSpec((C_PAD, C_OUT), lambda i: (0, 0)),
            pl.BlockSpec((1, C_OUT), lambda i: (0, 0)),
        ],
        out_specs=pl.BlockSpec((1, hp, wp, C_OUT), lambda i: (i, 0, 0, 0)),
        scratch_shapes=[pltpu.VMEM((hp + 2, wp + 2, C_PAD), jnp.float32)],
        compiler_params=pltpu.CompilerParams(
            dimension_semantics=("parallel",)),  # 2 images -> 2 TCs on v7x
    )(x_nhwc, prep["pool"], prep["wdw"], prep["bdw"], prep["w1"], prep["b1"])

    return jnp.transpose(out_nhwc, (0, 3, 1, 2))                  # back to NCHW


# ----------------------------------------------------------------------------
# Main
# ----------------------------------------------------------------------------

if __name__ == "__main__":
    key = jax.random.PRNGKey(0)
    kx, kp = jax.random.split(key)

    N, H, W = 2, 16, 16
    x_nchw = jax.random.normal(kx, (N, C_IN, H, W), jnp.float32)

    params = init_params(kp)
    prep = prepare_params(params, H, W)

    fwd = jax.jit(inputlayer1_forward)
    out = fwd(prep, x_nchw)
    out = jax.block_until_ready(out)

    assert out.shape == (N, C_OUT, (H + 1) // 2, (W + 1) // 2), out.shape
    assert bool(jnp.all(jnp.isfinite(out)))
    print("KERNEL_OK")
</pallas_src>

<mosaic_0001>
module attributes {stable_mosaic.version = 11 : i64} {
  func.func @_inputlayer1_kernel(%arg0: i32, %arg1: memref<1x16x16x8xf32, #tpu.memory_space<vmem>>, %arg2: memref<64x256xf32, #tpu.memory_space<vmem>>, %arg3: memref<9x8xf32, #tpu.memory_space<vmem>>, %arg4: memref<1x8xf32, #tpu.memory_space<vmem>>, %arg5: memref<8x32xf32, #tpu.memory_space<vmem>>, %arg6: memref<1x32xf32, #tpu.memory_space<vmem>>, %arg7: memref<1x8x8x32xf32, #tpu.memory_space<vmem>>, %arg8: memref<10x10x8xf32, #tpu.memory_space<vmem>>) attributes {dimension_semantics = [#tpu.dimension_semantics<parallel>], iteration_bounds = array<i64: 2>, scalar_prefetch = 0 : i64, scratch_operands = 1 : i64, tpu.core_type = #tpu.core_type<tc>, window_params = [{transform_indices = @transform_0, window_bounds = array<i64: 1, 16, 16, 8>}, {pipeline_mode = #tpu.pipeline_mode<synchronous>, transform_indices = @transform_1, window_bounds = array<i64: 64, 256>}, {pipeline_mode = #tpu.pipeline_mode<synchronous>, transform_indices = @transform_2, window_bounds = array<i64: 9, 8>}, {pipeline_mode = #tpu.pipeline_mode<synchronous>, transform_indices = @transform_3, window_bounds = array<i64: 1, 8>}, {pipeline_mode = #tpu.pipeline_mode<synchronous>, transform_indices = @transform_4, window_bounds = array<i64: 8, 32>}, {pipeline_mode = #tpu.pipeline_mode<synchronous>, transform_indices = @transform_5, window_bounds = array<i64: 1, 32>}, {transform_indices = @transform_6, window_bounds = array<i64: 1, 8, 8, 32>}]} {
    %c0 = arith.constant 0 : index
    %c0_0 = arith.constant 0 : index
    %c0_1 = arith.constant 0 : index
    %c0_2 = arith.constant 0 : index
    %0 = vector.load %arg1[%c0, %c0_0, %c0_1, %c0_2] : memref<1x16x16x8xf32, #tpu.memory_space<vmem>>, vector<1x16x16x8xf32>
    %1 = vector.shape_cast %0 : vector<1x16x16x8xf32> to vector<16x16x8xf32>
    %2 = vector.shape_cast %1 : vector<16x16x8xf32> to vector<256x8xf32>
    %c0_3 = arith.constant 0 : index
    %c0_4 = arith.constant 0 : index
    %3 = vector.load %arg2[%c0_3, %c0_4] : memref<64x256xf32, #tpu.memory_space<vmem>>, vector<64x256xf32>
    %cst = arith.constant dense<0.000000e+00> : vector<64x8xf32>
    %4 = tpu.matmul %3, %2, %cst {dimension_numbers = #tpu.dot_dimension_numbers<[1], [0], [0], [1], [0, 0, 1, 1], [], []>} : vector<64x256xf32>, vector<256x8xf32>, vector<64x8xf32> -> vector<64x8xf32>
    %cst_5 = arith.constant 0.000000e+00 : f32
    %5 = vector.broadcast %cst_5 : f32 to vector<10x10x8xf32>
    %c0_6 = arith.constant 0 : index
    %c0_7 = arith.constant 0 : index
    %c0_8 = arith.constant 0 : index
    %6 = vector.load %arg8[%c0_6, %c0_7, %c0_8] : memref<10x10x8xf32, #tpu.memory_space<vmem>>, vector<10x10x8xf32>
    tpu.vector_store %arg8[%c0_6, %c0_7, %c0_8], %5 {strides = array<i32>} : memref<10x10x8xf32, #tpu.memory_space<vmem>>, vector<10x10x8xf32>,
    %7 = vector.shape_cast %4 : vector<64x8xf32> to vector<8x8x8xf32>
    %c1 = arith.constant 1 : index
    %c1_9 = arith.constant 1 : index
    %c0_10 = arith.constant 0 : index
    %8 = vector.load %arg8[%c1, %c1_9, %c0_10] : memref<10x10x8xf32, #tpu.memory_space<vmem>>, vector<8x8x8xf32>
    tpu.vector_store %arg8[%c1, %c1_9, %c0_10], %7 {strides = array<i32>} : memref<10x10x8xf32, #tpu.memory_space<vmem>>, vector<8x8x8xf32>,
    %c0_11 = arith.constant 0 : index
    %c0_12 = arith.constant 0 : index
    %9 = vector.load %arg3[%c0_11, %c0_12] : memref<9x8xf32, #tpu.memory_space<vmem>>, vector<9x8xf32>
    %cst_13 = arith.constant 0.000000e+00 : f32
    %10 = vector.broadcast %cst_13 : f32 to vector<8x8x8xf32>
    %c0_14 = arith.constant 0 : index
    %c0_15 = arith.constant 0 : index
    %c0_16 = arith.constant 0 : index
    %11 = vector.load %arg8[%c0_14, %c0_15, %c0_16] : memref<10x10x8xf32, #tpu.memory_space<vmem>>, vector<8x8x8xf32>
    %12 = vector.extract_strided_slice %9 {offsets = [0, 0], sizes = [1, 8], strides = [1, 1]} : vector<9x8xf32> to vector<1x8xf32>
    %13 = vector.shape_cast %12 : vector<1x8xf32> to vector<1x1x8xf32>
    %14 = vector.broadcast %13 : vector<1x1x8xf32> to vector<8x8x8xf32>
    %15 = arith.mulf %11, %14 : vector<8x8x8xf32>
    %16 = arith.addf %10, %15 : vector<8x8x8xf32>
    %c0_17 = arith.constant 0 : index
    %c1_18 = arith.constant 1 : index
    %c0_19 = arith.constant 0 : index
    %17 = vector.load %arg8[%c0_17, %c1_18, %c0_19] : memref<10x10x8xf32, #tpu.memory_space<vmem>>, vector<8x8x8xf32>
    %18 = vector.extract_strided_slice %9 {offsets = [1, 0], sizes = [1, 8], strides = [1, 1]} : vector<9x8xf32> to vector<1x8xf32>
    %19 = vector.shape_cast %18 : vector<1x8xf32> to vector<1x1x8xf32>
    %20 = vector.broadcast %19 : vector<1x1x8xf32> to vector<8x8x8xf32>
    %21 = arith.mulf %17, %20 : vector<8x8x8xf32>
    %22 = arith.addf %16, %21 : vector<8x8x8xf32>
    %c0_20 = arith.constant 0 : index
    %c2 = arith.constant 2 : index
    %c0_21 = arith.constant 0 : index
    %23 = vector.load %arg8[%c0_20, %c2, %c0_21] : memref<10x10x8xf32, #tpu.memory_space<vmem>>, vector<8x8x8xf32>
    %24 = vector.extract_strided_slice %9 {offsets = [2, 0], sizes = [1, 8], strides = [1, 1]} : vector<9x8xf32> to vector<1x8xf32>
    %25 = vector.shape_cast %24 : vector<1x8xf32> to vector<1x1x8xf32>
    %26 = vector.broadcast %25 : vector<1x1x8xf32> to vector<8x8x8xf32>
    %27 = arith.mulf %23, %26 : vector<8x8x8xf32>
    %28 = arith.addf %22, %27 : vector<8x8x8xf32>
    %c1_22 = arith.constant 1 : index
    %c0_23 = arith.constant 0 : index
    %c0_24 = arith.constant 0 : index
    %29 = vector.load %arg8[%c1_22, %c0_23, %c0_24] : memref<10x10x8xf32, #tpu.memory_space<vmem>>, vector<8x8x8xf32>
    %30 = vector.extract_strided_slice %9 {offsets = [3, 0], sizes = [1, 8], strides = [1, 1]} : vector<9x8xf32> to vector<1x8xf32>
    %31 = vector.shape_cast %30 : vector<1x8xf32> to vector<1x1x8xf32>
    %32 = vector.broadcast %31 : vector<1x1x8xf32> to vector<8x8x8xf32>
    %33 = arith.mulf %29, %32 : vector<8x8x8xf32>
    %34 = arith.addf %28, %33 : vector<8x8x8xf32>
    %c1_25 = arith.constant 1 : index
    %c1_26 = arith.constant 1 : index
    %c0_27 = arith.constant 0 : index
    %35 = vector.load %arg8[%c1_25, %c1_26, %c0_27] : memref<10x10x8xf32, #tpu.memory_space<vmem>>, vector<8x8x8xf32>
    %36 = vector.extract_strided_slice %9 {offsets = [4, 0], sizes = [1, 8], strides = [1, 1]} : vector<9x8xf32> to vector<1x8xf32>
    %37 = vector.shape_cast %36 : vector<1x8xf32> to vector<1x1x8xf32>
    %38 = vector.broadcast %37 : vector<1x1x8xf32> to vector<8x8x8xf32>
    %39 = arith.mulf %35, %38 : vector<8x8x8xf32>
    %40 = arith.addf %34, %39 : vector<8x8x8xf32>
    %c1_28 = arith.constant 1 : index
    %c2_29 = arith.constant 2 : index
    %c0_30 = arith.constant 0 : index
    %41 = vector.load %arg8[%c1_28, %c2_29, %c0_30] : memref<10x10x8xf32, #tpu.memory_space<vmem>>, vector<8x8x8xf32>
    %42 = vector.extract_strided_slice %9 {offsets = [5, 0], sizes = [1, 8], strides = [1, 1]} : vector<9x8xf32> to vector<1x8xf32>
    %43 = vector.shape_cast %42 : vector<1x8xf32> to vector<1x1x8xf32>
    %44 = vector.broadcast %43 : vector<1x1x8xf32> to vector<8x8x8xf32>
    %45 = arith.mulf %41, %44 : vector<8x8x8xf32>
    %46 = arith.addf %40, %45 : vector<8x8x8xf32>
    %c2_31 = arith.constant 2 : index
    %c0_32 = arith.constant 0 : index
    %c0_33 = arith.constant 0 : index
    %47 = vector.load %arg8[%c2_31, %c0_32, %c0_33] : memref<10x10x8xf32, #tpu.memory_space<vmem>>, vector<8x8x8xf32>
    %48 = vector.extract_strided_slice %9 {offsets = [6, 0], sizes = [1, 8], strides = [1, 1]} : vector<9x8xf32> to vector<1x8xf32>
    %49 = vector.shape_cast %48 : vector<1x8xf32> to vector<1x1x8xf32>
    %50 = vector.broadcast %49 : vector<1x1x8xf32> to vector<8x8x8xf32>
    %51 = arith.mulf %47, %50 : vector<8x8x8xf32>
    %52 = arith.addf %46, %51 : vector<8x8x8xf32>
    %c2_34 = arith.constant 2 : index
    %c1_35 = arith.constant 1 : index
    %c0_36 = arith.constant 0 : index
    %53 = vector.load %arg8[%c2_34, %c1_35, %c0_36] : memref<10x10x8xf32, #tpu.memory_space<vmem>>, vector<8x8x8xf32>
    %54 = vector.extract_strided_slice %9 {offsets = [7, 0], sizes = [1, 8], strides = [1, 1]} : vector<9x8xf32> to vector<1x8xf32>
    %55 = vector.shape_cast %54 : vector<1x8xf32> to vector<1x1x8xf32>
    %56 = vector.broadcast %55 : vector<1x1x8xf32> to vector<8x8x8xf32>
    %57 = arith.mulf %53, %56 : vector<8x8x8xf32>
    %58 = arith.addf %52, %57 : vector<8x8x8xf32>
    %c2_37 = arith.constant 2 : index
    %c2_38 = arith.constant 2 : index
    %c0_39 = arith.constant 0 : index
    %59 = vector.load %arg8[%c2_37, %c2_38, %c0_39] : memref<10x10x8xf32, #tpu.memory_space<vmem>>, vector<8x8x8xf32>
    %60 = vector.extract_strided_slice %9 {offsets = [8, 0], sizes = [1, 8], strides = [1, 1]} : vector<9x8xf32> to vector<1x8xf32>
    %61 = vector.shape_cast %60 : vector<1x8xf32> to vector<1x1x8xf32>
    %62 = vector.broadcast %61 : vector<1x1x8xf32> to vector<8x8x8xf32>
    %63 = arith.mulf %59, %62 : vector<8x8x8xf32>
    %64 = arith.addf %58, %63 : vector<8x8x8xf32>
    %c0_40 = arith.constant 0 : index
    %c0_41 = arith.constant 0 : index
    %65 = vector.load %arg4[%c0_40, %c0_41] : memref<1x8xf32, #tpu.memory_space<vmem>>, vector<1x8xf32>
    %66 = vector.shape_cast %65 : vector<1x8xf32> to vector<1x1x8xf32>
    %67 = vector.broadcast %66 : vector<1x1x8xf32> to vector<8x8x8xf32>
    %68 = arith.addf %64, %67 : vector<8x8x8xf32>
    %69 = vector.shape_cast %68 : vector<8x8x8xf32> to vector<64x8xf32>
    %c0_42 = arith.constant 0 : index
    %c0_43 = arith.constant 0 : index
    %70 = vector.load %arg5[%c0_42, %c0_43] : memref<8x32xf32, #tpu.memory_space<vmem>>, vector<8x32xf32>
    %cst_44 = arith.constant dense<0.000000e+00> : vector<64x32xf32>
    %71 = tpu.matmul %69, %70, %cst_44 {dimension_numbers = #tpu.dot_dimension_numbers<[1], [0], [0], [1], [0, 0, 1, 1], [], []>} : vector<64x8xf32>, vector<8x32xf32>, vector<64x32xf32> -> vector<64x32xf32>
    %c0_45 = arith.constant 0 : index
    %c0_46 = arith.constant 0 : index
    %72 = vector.load %arg6[%c0_45, %c0_46] : memref<1x32xf32, #tpu.memory_space<vmem>>, vector<1x32xf32>
    %73 = vector.broadcast %72 : vector<1x32xf32> to vector<64x32xf32>
    %74 = arith.addf %71, %73 : vector<64x32xf32>
    %cst_47 = arith.constant 0.000000e+00 : f32
    %75 = vector.broadcast %cst_47 : f32 to vector<64x32xf32>
    %76 = arith.maximumf %74, %75 : vector<64x32xf32>
    %77 = vector.shape_cast %76 : vector<64x32xf32> to vector<8x8x32xf32>
    %c0_48 = arith.constant 0 : index
    %c0_49 = arith.constant 0 : index
    %c0_50 = arith.constant 0 : index
    %c0_51 = arith.constant 0 : index
    %78 = vector.load %arg7[%c0_48, %c0_49, %c0_50, %c0_51] : memref<1x8x8x32xf32, #tpu.memory_space<vmem>>, vector<1x8x8x32xf32>
    %79 = vector.shape_cast %78 : vector<1x8x8x32xf32> to vector<8x8x32xf32>
    %80 = vector.shape_cast %77 : vector<8x8x32xf32> to vector<1x8x8x32xf32>
    tpu.vector_store %arg7[%c0_48, %c0_49, %c0_50, %c0_51], %80 {strides = array<i32>} : memref<1x8x8x32xf32, #tpu.memory_space<vmem>>, vector<1x8x8x32xf32>,
    return
  }
  func.func @transform_0(%arg0: i32) -> (i32, i32, i32, i32) {
    %c0_i32 = arith.constant 0 : i32
    %c0_i32_0 = arith.constant 0 : i32
    %c0_i32_1 = arith.constant 0 : i32
    %c0_i32_2 = arith.constant 0 : i32
    return %arg0, %c0_i32, %c0_i32_0, %c0_i32_1 : i32, i32, i32, i32
  }
  func.func @transform_1(%arg0: i32) -> (i32, i32) {
    %c0_i32 = arith.constant 0 : i32
    %c0_i32_0 = arith.constant 0 : i32
    %c0_i32_1 = arith.constant 0 : i32
    return %c0_i32, %c0_i32_0 : i32, i32
  }
  func.func @transform_2(%arg0: i32) -> (i32, i32) {
    %c0_i32 = arith.constant 0 : i32
    %c0_i32_0 = arith.constant 0 : i32
    %c0_i32_1 = arith.constant 0 : i32
    return %c0_i32, %c0_i32_0 : i32, i32
  }
  func.func @transform_3(%arg0: i32) -> (i32, i32) {
    %c0_i32 = arith.constant 0 : i32
    %c0_i32_0 = arith.constant 0 : i32
    %c0_i32_1 = arith.constant 0 : i32
    return %c0_i32, %c0_i32_0 : i32, i32
  }
  func.func @transform_4(%arg0: i32) -> (i32, i32) {
    %c0_i32 = arith.constant 0 : i32
    %c0_i32_0 = arith.constant 0 : i32
    %c0_i32_1 = arith.constant 0 : i32
    return %c0_i32, %c0_i32_0 : i32, i32
  }
  func.func @transform_5(%arg0: i32) -> (i32, i32) {
    %c0_i32 = arith.constant 0 : i32
    %c0_i32_0 = arith.constant 0 : i32
    %c0_i32_1 = arith.constant 0 : i32
    return %c0_i32, %c0_i32_0 : i32, i32
  }
  func.func @transform_6(%arg0: i32) -> (i32, i32, i32, i32) {
    %c0_i32 = arith.constant 0 : i32
    %c0_i32_0 = arith.constant 0 : i32
    %c0_i32_1 = arith.constant 0 : i32
    %c0_i32_2 = arith.constant 0 : i32
    return %arg0, %c0_i32, %c0_i32_0, %c0_i32_1 : i32, i32, i32, i32
  }
}

</mosaic_0001>

<llo_original>
// kernel: inputlayer1_forward.1
$region0: #{inputlayer1_forward.1}
  #allocation0 [shape = 'u32[]', space=smem, size = 0x4, offset = 0x4, fixed_abs, tag = 'smem constant byte address 0x4 - core index']
  #allocation1 [shape = 'u32[72,128]{1,0:T(1,128)}', space=vmem, size = 0x9000, scoped, tag = 'internal scratch']
  #allocation2 [shape = 'f32[10,10,8]{2,1,0:T(8,128)}', space=vmem, size = 0x14000, scoped, tag = 'scratch operand']
  %s0 = inlined_call_operand.vmem [shape: f32[2,16,16,8], index: 0, kind: input, shape index: {}]
  %s1 = inlined_call_operand.vmem [shape: f32[64,256], index: 1, kind: input, shape index: {}]
  %s2 = inlined_call_operand.vmem [shape: f32[9,8], index: 2, kind: input, shape index: {}]
  %s3 = inlined_call_operand.vmem [shape: f32[1,8], index: 3, kind: input, shape index: {}]
  %s4 = inlined_call_operand.vmem [shape: f32[8,32], index: 4, kind: input, shape index: {}]
  %s5 = inlined_call_operand.vmem [shape: f32[1,32], index: 5, kind: input, shape index: {}]
  %s6 = inlined_call_operand.hbm [shape: f32[2,8,8,32], index: 6, kind: output, shape index: {}]
  %s7 = sld [smem:[#allocation0]]
  $region57: #{inputlayer1_forward.1} parent=0
    _
  %s9 = ssub.s32 1, %s7
  %s10 = scalar_select 0, %s9, %s7
  $region1: #{inputlayer1_forward.1} parent=0
    #allocation3 [shape = 'u8[65536]{0}', space=vmem, size = 0x10000, scoped, tag = 'output window, operand 0']
    #allocation4 [shape = 's32[2]{0}', space=sflag, size = 0x8, scoped, tag = 'scoped memory for inputlayer1_forward.1']
    %11 = vsyncpa [#allocation4], 0
    %s12 = scalar_lea.sflag [#allocation4], 1
    %13 = vsyncpa %s12, 0
    loop: start=0, step=1, limit=4
    $region2: #{inputlayer1_forward.1} parent=1 // loop_pre_header
      _
    $region3: #{inputlayer1_forward.1} parent=1 // loop_header
      %s15 = sphi 0, %s19
      %p16 = scmp.ge.s32.totalorder %s15, 4
      %s25 = sphi 0, %s27
      %s28 = sphi 0, %s25
      %s29 = sphi 0, %s28
      %s45 = sphi 0, %s29
      %s49 = sphi 0, %s49
      %s51 = sphi 0, %s49
      %s52 = sphi 0, %s51
      %s66 = sphi 0, %s52
      %s70 = sphi 0, %s70
      %s72 = sphi 0, %s70
      %s73 = sphi 0, %s72
      %s87 = sphi 0, %s73
      %s91 = sphi 0, %s91
      %s93 = sphi 0, %s91
      %s94 = sphi 0, %s93
      %s108 = sphi 0, %s94
      %s112 = sphi 0, %s112
      %s114 = sphi 0, %s112
      %s115 = sphi 0, %s114
      %s129 = sphi 0, %s115
      %s133 = sphi 0, %s133
      %s135 = sphi 0, %s133
      %s136 = sphi 0, %s135
      %s150 = sphi 0, %s136
      %s156 = sphi 0, %s158
      %s159 = sphi 0, %s156
      %s160 = sphi 0, %s159
      %s176 = sphi 0, %s160
    $region4: #{inputlayer1_forward.1} parent=1 // loop_header_branch
      %18 = sbr.rel (%p16) target = $region8
    $region5: #{inputlayer1_forward.1} parent=1 // loop_body
      %s20 = ssub.s32 %s15, 1
      %s21 = ssub.s32 %s15, 2
      %s22 = sadd.s32 %s15, 1
      %s23 = ssub.s32 %s15, %s22
      %p24 = scmp.eq.s32.totalorder %s23, 0
      %s26 = sadd.s32 %s25, 1
      %s27 = scalar_select %p24, %s25, %s26
      %p30 = pneg %p24
      %p31 = scmp.eq.s32.totalorder %s15, 1
      %p32 = por %p30, %p31
      %p33 = scmp.ne.s32.totalorder %s25, %s28
      %p34 = scmp.eq.s32.totalorder %s15, 0
      %p35 = por %p33, %p34
      %p36 = scmp.ne.s32.totalorder %s25, %s28
      %p37 = scmp.eq.s32.totalorder %s20, 1
      %p38 = por %p36, %p37
      %p39 = scmp.ne.s32.totalorder %s28, %s29
      %p40 = scmp.eq.s32.totalorder %s20, 0
      %p41 = por %p39, %p40
      %p42 = scmp.ne.s32.totalorder %s28, %s29
      %p43 = scmp.eq.s32.totalorder %s21, 1
      %p44 = por %p42, %p43
      %p46 = scmp.ne.s32.totalorder %s29, %s45
      %p47 = scmp.eq.s32.totalorder %s21, 0
      %p48 = por %p46, %p47
      %s50 = sadd.s32 %s49, 1
      %p53 = scmp.eq.s32.totalorder %s15, 1
      %p54 = scmp.ne.s32.totalorder %s49, %s51
      %p55 = scmp.eq.s32.totalorder %s15, 0
      %p56 = por %p54, %p55
      %p57 = scmp.ne.s32.totalorder %s49, %s51
      %p58 = scmp.eq.s32.totalorder %s20, 1
      %p59 = por %p57, %p58
      %p60 = scmp.ne.s32.totalorder %s51, %s52
      %p61 = scmp.eq.s32.totalorder %s20, 0
      %p62 = por %p60, %p61
      %p63 = scmp.ne.s32.totalorder %s51, %s52
      %p64 = scmp.eq.s32.totalorder %s21, 1
      %p65 = por %p63, %p64
      %p67 = scmp.ne.s32.totalorder %s52, %s66
      %p68 = scmp.eq.s32.totalorder %s21, 0
      %p69 = por %p67, %p68
      %s71 = sadd.s32 %s70, 1
      %p74 = scmp.eq.s32.totalorder %s15, 1
      %p75 = scmp.ne.s32.totalorder %s70, %s72
      %p76 = scmp.eq.s32.totalorder %s15, 0
      %p77 = por %p75, %p76
      %p78 = scmp.ne.s32.totalorder %s70, %s72
      %p79 = scmp.eq.s32.totalorder %s20, 1
      %p80 = por %p78, %p79
      %p81 = scmp.ne.s32.totalorder %s72, %s73
      %p82 = scmp.eq.s32.totalorder %s20, 0
      %p83 = por %p81, %p82
      %p84 = scmp.ne.s32.totalorder %s72, %s73
      %p85 = scmp.eq.s32.totalorder %s21, 1
      %p86 = por %p84, %p85
      %p88 = scmp.ne.s32.totalorder %s73, %s87
      %p89 = scmp.eq.s32.totalorder %s21, 0
      %p90 = por %p88, %p89
      %s92 = sadd.s32 %s91, 1
      %p95 = scmp.eq.s32.totalorder %s15, 1
      %p96 = scmp.ne.s32.totalorder %s91, %s93
      %p97 = scmp.eq.s32.totalorder %s15, 0
      %p98 = por %p96, %p97
      %p99 = scmp.ne.s32.totalorder %s91, %s93
      %p100 = scmp.eq.s32.totalorder %s20, 1
      %p101 = por %p99, %p100
      %p102 = scmp.ne.s32.totalorder %s93, %s94
      %p103 = scmp.eq.s32.totalorder %s20, 0
      %p104 = por %p102, %p103
      %p105 = scmp.ne.s32.totalorder %s93, %s94
      %p106 = scmp.eq.s32.totalorder %s21, 1
      %p107 = por %p105, %p106
      %p109 = scmp.ne.s32.totalorder %s94, %s108
      %p110 = scmp.eq.s32.totalorder %s21, 0
      %p111 = por %p109, %p110
      %s113 = sadd.s32 %s112, 1
      %p116 = scmp.eq.s32.totalorder %s15, 1
      %p117 = scmp.ne.s32.totalorder %s112, %s114
      %p118 = scmp.eq.s32.totalorder %s15, 0
      %p119 = por %p117, %p118
      %p120 = scmp.ne.s32.totalorder %s112, %s114
      %p121 = scmp.eq.s32.totalorder %s20, 1
      %p122 = por %p120, %p121
      %p123 = scmp.ne.s32.totalorder %s114, %s115
      %p124 = scmp.eq.s32.totalorder %s20, 0
      %p125 = por %p123, %p124
      %p126 = scmp.ne.s32.totalorder %s114, %s115
      %p127 = scmp.eq.s32.totalorder %s21, 1
      %p128 = por %p126, %p127
      %p130 = scmp.ne.s32.totalorder %s115, %s129
      %p131 = scmp.eq.s32.totalorder %s21, 0
      %p132 = por %p130, %p131
      %s134 = sadd.s32 %s133, 1
      %p137 = scmp.eq.s32.totalorder %s15, 1
      %p138 = scmp.ne.s32.totalorder %s133, %s135
      %p139 = scmp.eq.s32.totalorder %s15, 0
      %p140 = por %p138, %p139
      %p141 = scmp.ne.s32.totalorder %s133, %s135
      %p142 = scmp.eq.s32.totalorder %s20, 1
      %p143 = por %p141, %p142
      %p144 = scmp.ne.s32.totalorder %s135, %s136
      %p145 = scmp.eq.s32.totalorder %s20, 0
      %p146 = por %p144, %p145
      %p147 = scmp.ne.s32.totalorder %s135, %s136
      %p148 = scmp.eq.s32.totalorder %s21, 1
      %p149 = por %p147, %p148
      %p151 = scmp.ne.s32.totalorder %s136, %s150
      %p152 = scmp.eq.s32.totalorder %s21, 0
      %p153 = por %p151, %p152
      %s154 = ssub.s32 %s15, %s22
      %p155 = scmp.eq.s32.totalorder %s154, 0
      %s157 = sadd.s32 %s156, 1
      %s158 = scalar_select %p155, %s156, %s157
      %p161 = pneg %p155
      %p162 = scmp.eq.s32.totalorder %s15, 1
      %p163 = por %p161, %p162
      %p164 = scmp.ne.s32.totalorder %s156, %s159
      %p165 = scmp.eq.s32.totalorder %s15, 0
      %p166 = por %p164, %p165
      %p167 = scmp.ne.s32.totalorder %s156, %s159
      %p168 = scmp.eq.s32.totalorder %s20, 1
      %p169 = por %p167, %p168
      %p170 = scmp.ne.s32.totalorder %s159, %s160
      %p171 = scmp.eq.s32.totalorder %s20, 0
      %p172 = por %p170, %p171
      %p173 = scmp.ne.s32.totalorder %s159, %s160
      %p174 = scmp.eq.s32.totalorder %s21, 1
      %p175 = por %p173, %p174
      %p177 = scmp.ne.s32.totalorder %s160, %s176
      %p178 = scmp.eq.s32.totalorder %s21, 0
      %p179 = por %p177, %p178
      %p180 = scmp.le.s32.totalorder 1, %s15
      %p181 = scmp.lt.s32.totalorder %s15, 3
      %p182 = pnand %p180, %p181
      %p183 = pneg %p182
      // Predicated region
      $region9: #{inputlayer1_forward.1} parent=5 // pred_check
        _
      $region10: #{inputlayer1_forward.1} parent=5 // pred_check_branch
        %185 = sbr.rel (%p182) target = $region12
      $region11: #{inputlayer1_forward.1} parent=5 // pred_region
        %s186 = ssub.s32 %s15, 1
        // Predicated region
        $region13: #{inputlayer1_forward.1} parent=11 // pred_check
          %p187 = pneg %p62
        $region14: #{inputlayer1_forward.1} parent=11 // pred_check_branch
          %189 = sbr.rel (%p187) target = $region16
        $region15: #{inputlayer1_forward.1} parent=11 // pred_region
          _
        $region16: #{inputlayer1_forward.1} parent=11 // pred_fallthru
          _
        // Predicated region
        $region17: #{inputlayer1_forward.1} parent=11 // pred_check
          %p190 = pneg %p83
        $region18: #{inputlayer1_forward.1} parent=11 // pred_check_branch
          %192 = sbr.rel (%p190) target = $region20
        $region19: #{inputlayer1_forward.1} parent=11 // pred_region
          _
        $region20: #{inputlayer1_forward.1} parent=11 // pred_fallthru
          _
        // Predicated region
        $region21: #{inputlayer1_forward.1} parent=11 // pred_check
          %p193 = pneg %p104
        $region22: #{inputlayer1_forward.1} parent=11 // pred_check_branch
          %195 = sbr.rel (%p193) target = $region24
        $region23: #{inputlayer1_forward.1} parent=11 // pred_region
          _
        $region24: #{inputlayer1_forward.1} parent=11 // pred_fallthru
          _
        // Predicated region
        $region25: #{inputlayer1_forward.1} parent=11 // pred_check
          %p196 = pneg %p125
        $region26: #{inputlayer1_forward.1} parent=11 // pred_check_branch
          %198 = sbr.rel (%p196) target = $region28
        $region27: #{inputlayer1_forward.1} parent=11 // pred_region
          _
        $region28: #{inputlayer1_forward.1} parent=11 // pred_fallthru
          _
        // Predicated region
        $region29: #{inputlayer1_forward.1} parent=11 // pred_check
          %p199 = pneg %p146
        $region30: #{inputlayer1_forward.1} parent=11 // pred_check_branch
          %201 = sbr.rel (%p199) target = $region32
        $region31: #{inputlayer1_forward.1} parent=11 // pred_region
          _
        $region32: #{inputlayer1_forward.1} parent=11 // pred_fallthru
          _
      $region12: #{inputlayer1_forward.1} parent=5 // pred_fallthru
        _
      %p202 = scmp.lt.s32.totalorder %s15, 2
      // Predicated region
      $region33: #{inputlayer1_forward.1} parent=5 // pred_check
        %p203 = pneg %p202
      $region34: #{inputlayer1_forward.1} parent=5 // pred_check_branch
        %205 = sbr.rel (%p203) target = $region36
      $region35: #{inputlayer1_forward.1} parent=5 // pred_region
        // Predicated region
        $region37: #{inputlayer1_forward.1} parent=35 // pred_check
          %p206 = pneg %p35
        $region38: #{inputlayer1_forward.1} parent=35 // pred_check_branch
          %208 = sbr.rel (%p206) target = $region40
        $region39: #{inputlayer1_forward.1} parent=35 // pred_region
          %p209 = scmp.lt.s32.totalorder %s15, 1
          %s210 = scalar_select %p209, %s15, 1
          %s211 = smul.addr %s210, 32
          %s212 = smul.addr %s211, 8
          %s213 = scalar_lea.vmem %s0, %s212
        $region40: #{inputlayer1_forward.1} parent=35 // pred_fallthru
          _
      $region36: #{inputlayer1_forward.1} parent=5 // pred_fallthru
        _
      %p214 = scmp.le.s32.totalorder 1, %s15
      %p215 = scmp.lt.s32.totalorder %s15, 3
      %p216 = pnand %p214, %p215
      %p217 = pneg %p216
      // Predicated region
      $region41: #{inputlayer1_forward.1} parent=5 // pred_check
        _
      $region42: #{inputlayer1_forward.1} parent=5 // pred_check_branch
        %219 = sbr.rel (%p216) target = $region44
      $region43: #{inputlayer1_forward.1} parent=5 // pred_region
        %s220 = ssub.s32 %s15, 1
        %p221 = scmp.lt.s32.totalorder %s20, 1
        %s222 = scalar_select %p221, %s20, 1
        %s223 = smul.addr %s222, 32
        %s224 = smul.addr %s223, 8
        %s225 = scalar_lea.vmem %s0, %s224
        %p226 = pneg %p41
        %p227 = pneg %p38
        %p228 = pneg %p62
        %p229 = pneg %p59
        %p230 = pneg %p83
        %p231 = pneg %p80
        %p232 = pneg %p104
        %p233 = pneg %p101
        %p234 = pneg %p125
        %p235 = pneg %p122
        %p236 = pneg %p146
        %p237 = pneg %p143
        %p238 = pneg %p172
        %p239 = pneg %p169
        %s240 = sand.u32 %s159, 1
        %s241 = scalar_lea.sflag [#allocation4], %s240
        %s242 = sand.u32 %s159, 1
        %s243 = smul.addr %s242, 64
        %s244 = scalar_lea.vmem [#allocation3], %s243
        %p245 = scmp.lt.s32.totalorder %s20, 1
        %s246 = scalar_select %p245, %s20, 1
        %s247 = smul.addr %s246, 32
        %s248 = smul.addr %s247, 8
        %s249 = scalar_lea.vmem %s0, %s248
        %v250 = vld [vmem:[%s249] sm:$0xff]
        %v251 = vld [vmem:[%s249 + $0x8] sm:$0xff]
        %v252 = vld [vmem:[%s249 + $0x10] sm:$0xff]
        %v253 = vld [vmem:[%s249 + $0x18] sm:$0xff]
        %v254 = vld [vmem:[%s249 + $0x20] sm:$0xff]
        %v255 = vld [vmem:[%s249 + $0x28] sm:$0xff]
        %v256 = vld [vmem:[%s249 + $0x30] sm:$0xff]
        %v257 = vld [vmem:[%s249 + $0x38] sm:$0xff]
        %v258 = vld [vmem:[%s249 + $0x40] sm:$0xff]
        %v259 = vld [vmem:[%s249 + $0x48] sm:$0xff]
        %v260 = vld [vmem:[%s249 + $0x50] sm:$0xff]
        %v261 = vld [vmem:[%s249 + $0x58] sm:$0xff]
        %v262 = vld [vmem:[%s249 + $0x60] sm:$0xff]
        %v263 = vld [vmem:[%s249 + $0x68] sm:$0xff]
        %v264 = vld [vmem:[%s249 + $0x70] sm:$0xff]
        %v265 = vld [vmem:[%s249 + $0x78] sm:$0xff]
        %v266 = vld [vmem:[%s249 + $0x80] sm:$0xff]
        %v267 = vld [vmem:[%s249 + $0x88] sm:$0xff]
        %v268 = vld [vmem:[%s249 + $0x90] sm:$0xff]
        %v269 = vld [vmem:[%s249 + $0x98] sm:$0xff]
        %v270 = vld [vmem:[%s249 + $0xa0] sm:$0xff]
        %v271 = vld [vmem:[%s249 + $0xa8] sm:$0xff]
        %v272 = vld [vmem:[%s249 + $0xb0] sm:$0xff]
        %v273 = vld [vmem:[%s249 + $0xb8] sm:$0xff]
        %v274 = vld [vmem:[%s249 + $0xc0] sm:$0xff]
        %v275 = vld [vmem:[%s249 + $0xc8] sm:$0xff]
        %v276 = vld [vmem:[%s249 + $0xd0] sm:$0xff]
        %v277 = vld [vmem:[%s249 + $0xd8] sm:$0xff]
        %v278 = vld [vmem:[%s249 + $0xe0] sm:$0xff]
        %v279 = vld [vmem:[%s249 + $0xe8] sm:$0xff]
        %v280 = vld [vmem:[%s249 + $0xf0] sm:$0xff]
        %v281 = vld [vmem:[%s249 + $0xf8] sm:$0xff]
        %v282 = vld [vmem:[%s1] sm:$0xff]
        %v283 = vld [vmem:[%s1 + $0x8] sm:$0xff]
        %v284 = vld [vmem:[%s1 + $0x10] sm:$0xff]
        %v285 = vld [vmem:[%s1 + $0x18] sm:$0xff]
        %v286 = vld [vmem:[%s1 + $0x20] sm:$0xff]
        %v287 = vld [vmem:[%s1 + $0x28] sm:$0xff]
        %v288 = vld [vmem:[%s1 + $0x30] sm:$0xff]
        %v289 = vld [vmem:[%s1 + $0x38] sm:$0xff]
        %v290 = vld [vmem:[%s1 + $0x40] sm:$0xff]
        %v291 = vld [vmem:[%s1 + $0x48] sm:$0xff]
        %v292 = vld [vmem:[%s1 + $0x50] sm:$0xff]
        %v293 = vld [vmem:[%s1 + $0x58] sm:$0xff]
        %v294 = vld [vmem:[%s1 + $0x60] sm:$0xff]
        %v295 = vld [vmem:[%s1 + $0x68] sm:$0xff]
        %v296 = vld [vmem:[%s1 + $0x70] sm:$0xff]
        %v297 = vld [vmem:[%s1 + $0x78] sm:$0xff]
        %298 = vmatpush.msra.mxu0 %v265
        %299 = vmatpush.msra.mxu0 %v264
        %300 = vmatpush.msra.mxu0 %v263
        %301 = vmatpush.msra.mxu0 %v262
        %302 = vmatpush.msra.mxu0 %v261
        %303 = vmatpush.msra.mxu0 %v260
        %304 = vmatpush.msra.mxu0 %v259
        %305 = vmatpush.msra.mxu0 %v258
        %306 = vmatpush.msra.mxu0 %v257
        %307 = vmatpush.msra.mxu0 %v256
        %308 = vmatpush.msra.mxu0 %v255
        %309 = vmatpush.msra.mxu0 %v254
        %310 = vmatpush.msra.mxu0 %v253
        %311 = vmatpush.msra.mxu0 %v252
        %312 = vmatpush.msra.mxu0 %v251
        %313 = vmatpush.msra.mxu0 %v250
        %314 = vmatmul.f32.gmra.mxu0 %v282
        %v315 = vpop.f32.mrf.mxu0
        %v316 = vadd.f32 0.0, %v315
        %317 = vmatmul.f32.gmra.mxu0 %v284
        %v318 = vpop.f32.mrf.mxu0
        %v319 = vadd.f32 0.0, %v318
        %320 = vmatmul.f32.gmra.mxu0 %v286
        %v321 = vpop.f32.mrf.mxu0
        %v322 = vadd.f32 0.0, %v321
        %323 = vmatmul.f32.gmra.mxu0 %v288
        %v324 = vpop.f32.mrf.mxu0
        %v325 = vadd.f32 0.0, %v324
        %326 = vmatmul.f32.gmra.mxu0 %v290
        %v327 = vpop.f32.mrf.mxu0
        %v328 = vadd.f32 0.0, %v327
        %329 = vmatmul.f32.gmra.mxu0 %v292
        %v330 = vpop.f32.mrf.mxu0
        %v331 = vadd.f32 0.0, %v330
        %332 = vmatmul.f32.gmra.mxu0 %v294
        %v333 = vpop.f32.mrf.mxu0
        %v334 = vadd.f32 0.0, %v333
        %335 = vmatmul.f32.gmra.mxu0 %v296
        %v336 = vpop.f32.mrf.mxu0
        %v337 = vadd.f32 0.0, %v336
        %338 = vdwg.mxu0
        %339 = vmatpush.msra.mxu0 %v281
        %340 = vmatpush.msra.mxu0 %v280
        %341 = vmatpush.msra.mxu0 %v279
        %342 = vmatpush.msra.mxu0 %v278
        %343 = vmatpush.msra.mxu0 %v277
        %344 = vmatpush.msra.mxu0 %v276
        %345 = vmatpush.msra.mxu0 %v275
        %346 = vmatpush.msra.mxu0 %v274
        %347 = vmatpush.msra.mxu0 %v273
        %348 = vmatpush.msra.mxu0 %v272
        %349 = vmatpush.msra.mxu0 %v271
        %350 = vmatpush.msra.mxu0 %v270
        %351 = vmatpush.msra.mxu0 %v269
        %352 = vmatpush.msra.mxu0 %v268
        %353 = vmatpush.msra.mxu0 %v267
        %354 = vmatpush.msra.mxu0 %v266
        %355 = vmatmul.f32.gmra.mxu0 %v283
        %v356 = vpop.f32.mrf.mxu0
        %v357 = vadd.f32 %v316, %v356
        %358 = vmatmul.f32.gmra.mxu0 %v285
        %v359 = vpop.f32.mrf.mxu0
        %v360 = vadd.f32 %v319, %v359
        %361 = vmatmul.f32.gmra.mxu0 %v287
        %v362 = vpop.f32.mrf.mxu0
        %v363 = vadd.f32 %v322, %v362
        %364 = vmatmul.f32.gmra.mxu0 %v289
        %v365 = vpop.f32.mrf.mxu0
        %v366 = vadd.f32 %v325, %v365
        %367 = vmatmul.f32.gmra.mxu0 %v291
        %v368 = vpop.f32.mrf.mxu0
        %v369 = vadd.f32 %v328, %v368
        %370 = vmatmul.f32.gmra.mxu0 %v293
        %v371 = vpop.f32.mrf.mxu0
        %v372 = vadd.f32 %v331, %v371
        %373 = vmatmul.f32.gmra.mxu0 %v295
        %v374 = vpop.f32.mrf.mxu0
        %v375 = vadd.f32 %v334, %v374
        %376 = vmatmul.f32.gmra.mxu0 %v297
        %v377 = vpop.f32.mrf.mxu0
        %v378 = vadd.f32 %v337, %v377
        %379 = vdwg.mxu0
        %vm380 = vcmask 64512
        %381 = vst.msk [vmem:[#allocation2] sm:$0xff] %vm380, 0.0
        %vm382 = vcmask 58368
        %383 = vst.msk [vmem:[#allocation2 + $0x8] sm:$0x3] %vm382, 0.0
        %384 = vst.msk [vmem:[#allocation2 + $0x10] sm:$0xff] %vm380, 0.0
        %385 = vst.msk [vmem:[#allocation2 + $0x18] sm:$0x3] %vm382, 0.0
        %386 = vst.msk [vmem:[#allocation2 + $0x20] sm:$0xff] %vm380, 0.0
        %387 = vst.msk [vmem:[#allocation2 + $0x28] sm:$0x3] %vm382, 0.0
        %388 = vst.msk [vmem:[#allocation2 + $0x30] sm:$0xff] %vm380, 0.0
        %389 = vst.msk [vmem:[#allocation2 + $0x38] sm:$0x3] %vm382, 0.0
        %390 = vst.msk [vmem:[#allocation2 + $0x40] sm:$0xff] %vm380, 0.0
        %391 = vst.msk [vmem:[#allocation2 + $0x48] sm:$0x3] %vm382, 0.0
        %392 = vst.msk [vmem:[#allocation2 + $0x50] sm:$0xff] %vm380, 0.0
        %393 = vst.msk [vmem:[#allocation2 + $0x58] sm:$0x3] %vm382, 0.0
        %394 = vst.msk [vmem:[#allocation2 + $0x60] sm:$0xff] %vm380, 0.0
        %395 = vst.msk [vmem:[#allocation2 + $0x68] sm:$0x3] %vm382, 0.0
        %396 = vst.msk [vmem:[#allocation2 + $0x70] sm:$0xff] %vm380, 0.0
        %397 = vst.msk [vmem:[#allocation2 + $0x78] sm:$0x3] %vm382, 0.0
        %398 = vst.msk [vmem:[#allocation2 + $0x80] sm:$0xff] %vm380, 0.0
        %399 = vst.msk [vmem:[#allocation2 + $0x88] sm:$0x3] %vm382, 0.0
        %400 = vst.msk [vmem:[#allocation2 + $0x90] sm:$0xff] %vm380, 0.0
        %401 = vst.msk [vmem:[#allocation2 + $0x98] sm:$0x3] %vm382, 0.0
        %s402 = scalar_lea.vmem [#allocation2], 16
        %403 = vst.msk [vmem:[%s402 + $0x1] sm:$0xff] %vm380, %v357
        %404 = vst.msk [vmem:[%s402 + $0x11] sm:$0xff] %vm380, %v360
        %405 = vst.msk [vmem:[%s402 + $0x21] sm:$0xff] %vm380, %v363
        %406 = vst.msk [vmem:[%s402 + $0x31] sm:$0xff] %vm380, %v366
        %407 = vst.msk [vmem:[%s402 + $0x41] sm:$0xff] %vm380, %v369
        %408 = vst.msk [vmem:[%s402 + $0x51] sm:$0xff] %vm380, %v372
        %409 = vst.msk [vmem:[%s402 + $0x61] sm:$0xff] %vm380, %v375
        %410 = vst.msk [vmem:[%s402 + $0x71] sm:$0xff] %vm380, %v378
        %v411 = vld [vmem:[%s2] sm:$0xff]
        %v412 = vld [vmem:[%s2 + $0x8] sm:$0x1]
        %v413 = vld [vmem:[#allocation2] sm:$0xff]
        %v414 = vld [vmem:[#allocation2 + $0x10] sm:$0xff]
        %v415 = vld [vmem:[#allocation2 + $0x20] sm:$0xff]
        %v416 = vld [vmem:[#allocation2 + $0x30] sm:$0xff]
        %v417 = vld [vmem:[#allocation2 + $0x40] sm:$0xff]
        %v418 = vld [vmem:[#allocation2 + $0x50] sm:$0xff]
        %v419 = vld [vmem:[#allocation2 + $0x60] sm:$0xff]
        %v420 = vld [vmem:[#allocation2 + $0x70] sm:$0xff]
        %v421 = vperm.slane %v411, 0
        %v422 = vmul.f32 %v413, %v421
        %v423 = vmul.f32 %v414, %v421
        %v424 = vmul.f32 %v415, %v421
        %v425 = vmul.f32 %v416, %v421
        %v426 = vmul.f32 %v417, %v421
        %v427 = vmul.f32 %v418, %v421
        %v428 = vmul.f32 %v419, %v421
        %v429 = vmul.f32 %v420, %v421
        %v430 = vadd.f32 %v422, 0.0
        %v431 = vadd.f32 %v423, 0.0
        %v432 = vadd.f32 %v424, 0.0
        %v433 = vadd.f32 %v425, 0.0
        %v434 = vadd.f32 %v426, 0.0
        %v435 = vadd.f32 %v427, 0.0
        %v436 = vadd.f32 %v428, 0.0
        %v437 = vadd.f32 %v429, 0.0
        %v438 = vld [vmem:[#allocation2 + $0x1] sm:$0xff]
        %v439 = vld [vmem:[#allocation2 + $0x11] sm:$0xff]
        %v440 = vld [vmem:[#allocation2 + $0x21] sm:$0xff]
        %v441 = vld [vmem:[#allocation2 + $0x31] sm:$0xff]
        %v442 = vld [vmem:[#allocation2 + $0x41] sm:$0xff]
        %v443 = vld [vmem:[#allocation2 + $0x51] sm:$0xff]
        %v444 = vld [vmem:[#allocation2 + $0x61] sm:$0xff]
        %v445 = vld [vmem:[#allocation2 + $0x71] sm:$0xff]
        %v446 = vperm.slane %v411, 1
        %v447 = vmul.f32 %v438, %v446
        %v448 = vmul.f32 %v439, %v446
        %v449 = vmul.f32 %v440, %v446
        %v450 = vmul.f32 %v441, %v446
        %v451 = vmul.f32 %v442, %v446
        %v452 = vmul.f32 %v443, %v446
        %v453 = vmul.f32 %v444, %v446
        %v454 = vmul.f32 %v445, %v446
        %v455 = vadd.f32 %v430, %v447
        %v456 = vadd.f32 %v431, %v448
        %v457 = vadd.f32 %v432, %v449
        %v458 = vadd.f32 %v433, %v450
        %v459 = vadd.f32 %v434, %v451
        %v460 = vadd.f32 %v435, %v452
        %v461 = vadd.f32 %v436, %v453
        %v462 = vadd.f32 %v437, %v454
        %v463 = vld [vmem:[#allocation2 + $0x2] sm:$0xff]
        %v464 = vld [vmem:[#allocation2 + $0x12] sm:$0xff]
        %v465 = vld [vmem:[#allocation2 + $0x22] sm:$0xff]
        %v466 = vld [vmem:[#allocation2 + $0x32] sm:$0xff]
        %v467 = vld [vmem:[#allocation2 + $0x42] sm:$0xff]
        %v468 = vld [vmem:[#allocation2 + $0x52] sm:$0xff]
        %v469 = vld [vmem:[#allocation2 + $0x62] sm:$0xff]
        %v470 = vld [vmem:[#allocation2 + $0x72] sm:$0xff]
        %v471 = vperm.slane %v411, 2
        %v472 = vmul.f32 %v463, %v471
        %v473 = vmul.f32 %v464, %v471
        %v474 = vmul.f32 %v465, %v471
        %v475 = vmul.f32 %v466, %v471
        %v476 = vmul.f32 %v467, %v471
        %v477 = vmul.f32 %v468, %v471
        %v478 = vmul.f32 %v469, %v471
        %v479 = vmul.f32 %v470, %v471
        %v480 = vadd.f32 %v455, %v472
        %v481 = vadd.f32 %v456, %v473
        %v482 = vadd.f32 %v457, %v474
        %v483 = vadd.f32 %v458, %v475
        %v484 = vadd.f32 %v459, %v476
        %v485 = vadd.f32 %v460, %v477
        %v486 = vadd.f32 %v461, %v478
        %v487 = vadd.f32 %v462, %v479
        %v488 = vld [vmem:[%s402] sm:$0xff]
        %v489 = vld [vmem:[%s402 + $0x10] sm:$0xff]
        %v490 = vld [vmem:[%s402 + $0x20] sm:$0xff]
        %v491 = vld [vmem:[%s402 + $0x30] sm:$0xff]
        %v492 = vld [vmem:[%s402 + $0x40] sm:$0xff]
        %v493 = vld [vmem:[%s402 + $0x50] sm:$0xff]
        %v494 = vld [vmem:[%s402 + $0x60] sm:$0xff]
        %v495 = vld [vmem:[%s402 + $0x70] sm:$0xff]
        %v496 = vperm.slane %v411, 3
        %v497 = vmul.f32 %v488, %v496
        %v498 = vmul.f32 %v489, %v496
        %v499 = vmul.f32 %v490, %v496
        %v500 = vmul.f32 %v491, %v496
        %v501 = vmul.f32 %v492, %v496
        %v502 = vmul.f32 %v493, %v496
        %v503 = vmul.f32 %v494, %v496
        %v504 = vmul.f32 %v495, %v496
        %v505 = vadd.f32 %v480, %v497
        %v506 = vadd.f32 %v481, %v498
        %v507 = vadd.f32 %v482, %v499
        %v508 = vadd.f32 %v483, %v500
        %v509 = vadd.f32 %v484, %v501
        %v510 = vadd.f32 %v485, %v502
        %v511 = vadd.f32 %v486, %v503
        %v512 = vadd.f32 %v487, %v504
        %v513 = vld [vmem:[%s402 + $0x1] sm:$0xff]
        %v514 = vld [vmem:[%s402 + $0x11] sm:$0xff]
        %v515 = vld [vmem:[%s402 + $0x21] sm:$0xff]
        %v516 = vld [vmem:[%s402 + $0x31] sm:$0xff]
        %v517 = vld [vmem:[%s402 + $0x41] sm:$0xff]
        %v518 = vld [vmem:[%s402 + $0x51] sm:$0xff]
        %v519 = vld [vmem:[%s402 + $0x61] sm:$0xff]
        %v520 = vld [vmem:[%s402 + $0x71] sm:$0xff]
        %v521 = vperm.slane %v411, 4
        %v522 = vmul.f32 %v513, %v521
        %v523 = vmul.f32 %v514, %v521
        %v524 = vmul.f32 %v515, %v521
        %v525 = vmul.f32 %v516, %v521
        %v526 = vmul.f32 %v517, %v521
        %v527 = vmul.f32 %v518, %v521
        %v528 = vmul.f32 %v519, %v521
        %v529 = vmul.f32 %v520, %v521
        %v530 = vadd.f32 %v505, %v522
        %v531 = vadd.f32 %v506, %v523
        %v532 = vadd.f32 %v507, %v524
        %v533 = vadd.f32 %v508, %v525
        %v534 = vadd.f32 %v509, %v526
        %v535 = vadd.f32 %v510, %v527
        %v536 = vadd.f32 %v511, %v528
        %v537 = vadd.f32 %v512, %v529
        %v538 = vld [vmem:[%s402 + $0x2] sm:$0xff]
        %v539 = vld [vmem:[%s402 + $0x12] sm:$0xff]
        %v540 = vld [vmem:[%s402 + $0x22] sm:$0xff]
        %v541 = vld [vmem:[%s402 + $0x32] sm:$0xff]
        %v542 = vld [vmem:[%s402 + $0x42] sm:$0xff]
        %v543 = vld [vmem:[%s402 + $0x52] sm:$0xff]
        %v544 = vld [vmem:[%s402 + $0x62] sm:$0xff]
        %v545 = vld [vmem:[%s402 + $0x72] sm:$0xff]
        %v546 = vperm.slane %v411, 5
        %v547 = vmul.f32 %v538, %v546
        %v548 = vmul.f32 %v539, %v546
        %v549 = vmul.f32 %v540, %v546
        %v550 = vmul.f32 %v541, %v546
        %v551 = vmul.f32 %v542, %v546
        %v552 = vmul.f32 %v543, %v546
        %v553 = vmul.f32 %v544, %v546
        %v554 = vmul.f32 %v545, %v546
        %v555 = vadd.f32 %v530, %v547
        %v556 = vadd.f32 %v531, %v548
        %v557 = vadd.f32 %v532, %v549
        %v558 = vadd.f32 %v533, %v550
        %v559 = vadd.f32 %v534, %v551
        %v560 = vadd.f32 %v535, %v552
        %v561 = vadd.f32 %v536, %v553
        %v562 = vadd.f32 %v537, %v554
        %s563 = scalar_lea.vmem [#allocation2], 32
        %v564 = vld [vmem:[%s563] sm:$0xff]
        %v565 = vld [vmem:[%s563 + $0x10] sm:$0xff]
        %v566 = vld [vmem:[%s563 + $0x20] sm:$0xff]
        %v567 = vld [vmem:[%s563 + $0x30] sm:$0xff]
        %v568 = vld [vmem:[%s563 + $0x40] sm:$0xff]
        %v569 = vld [vmem:[%s563 + $0x50] sm:$0xff]
        %v570 = vld [vmem:[%s563 + $0x60] sm:$0xff]
        %v571 = vld [vmem:[%s563 + $0x70] sm:$0xff]
        %v572 = vperm.slane %v411, 6
        %v573 = vmul.f32 %v564, %v572
        %v574 = vmul.f32 %v565, %v572
        %v575 = vmul.f32 %v566, %v572
        %v576 = vmul.f32 %v567, %v572
        %v577 = vmul.f32 %v568, %v572
        %v578 = vmul.f32 %v569, %v572
        %v579 = vmul.f32 %v570, %v572
        %v580 = vmul.f32 %v571, %v572
        %v581 = vadd.f32 %v555, %v573
        %v582 = vadd.f32 %v556, %v574
        %v583 = vadd.f32 %v557, %v575
        %v584 = vadd.f32 %v558, %v576
        %v585 = vadd.f32 %v559, %v577
        %v586 = vadd.f32 %v560, %v578
        %v587 = vadd.f32 %v561, %v579
        %v588 = vadd.f32 %v562, %v580
        %v589 = vld [vmem:[%s563 + $0x1] sm:$0xff]
        %v590 = vld [vmem:[%s563 + $0x11] sm:$0xff]
        %v591 = vld [vmem:[%s563 + $0x21] sm:$0xff]
        %v592 = vld [vmem:[%s563 + $0x31] sm:$0xff]
        %v593 = vld [vmem:[%s563 + $0x41] sm:$0xff]
        %v594 = vld [vmem:[%s563 + $0x51] sm:$0xff]
        %v595 = vld [vmem:[%s563 + $0x61] sm:$0xff]
        %v596 = vld [vmem:[%s563 + $0x71] sm:$0xff]
        %v597 = vperm.slane %v411, 7
        %v598 = vmul.f32 %v589, %v597
        %v599 = vmul.f32 %v590, %v597
        %v600 = vmul.f32 %v591, %v597
        %v601 = vmul.f32 %v592, %v597
        %v602 = vmul.f32 %v593, %v597
        %v603 = vmul.f32 %v594, %v597
        %v604 = vmul.f32 %v595, %v597
        %v605 = vmul.f32 %v596, %v597
        %v606 = vadd.f32 %v581, %v598
        %v607 = vadd.f32 %v582, %v599
        %v608 = vadd.f32 %v583, %v600
        %v609 = vadd.f32 %v584, %v601
        %v610 = vadd.f32 %v585, %v602
        %v611 = vadd.f32 %v586, %v603
        %v612 = vadd.f32 %v587, %v604
        %v613 = vadd.f32 %v588, %v605
        %v614 = vld [vmem:[%s563 + $0x2] sm:$0xff]
        %v615 = vld [vmem:[%s563 + $0x12] sm:$0xff]
        %v616 = vld [vmem:[%s563 + $0x22] sm:$0xff]
        %v617 = vld [vmem:[%s563 + $0x32] sm:$0xff]
        %v618 = vld [vmem:[%s563 + $0x42] sm:$0xff]
        %v619 = vld [vmem:[%s563 + $0x52] sm:$0xff]
        %v620 = vld [vmem:[%s563 + $0x62] sm:$0xff]
        %v621 = vld [vmem:[%s563 + $0x72] sm:$0xff]
        %v622 = vperm.slane %v412, 0
        %v623 = vmul.f32 %v614, %v622
        %v624 = vmul.f32 %v615, %v622
        %v625 = vmul.f32 %v616, %v622
        %v626 = vmul.f32 %v617, %v622
        %v627 = vmul.f32 %v618, %v622
        %v628 = vmul.f32 %v619, %v622
        %v629 = vmul.f32 %v620, %v622
        %v630 = vmul.f32 %v621, %v622
        %v631 = vadd.f32 %v606, %v623
        %v632 = vadd.f32 %v607, %v624
        %v633 = vadd.f32 %v608, %v625
        %v634 = vadd.f32 %v609, %v626
        %v635 = vadd.f32 %v610, %v627
        %v636 = vadd.f32 %v611, %v628
        %v637 = vadd.f32 %v612, %v629
        %v638 = vadd.f32 %v613, %v630
        %v639 = vld [vmem:[%s3] sm:$0x1]
        %v641 = vperm.slane %v639, 0
        %v643 = vadd.f32 %v631, %v641
        %v644 = vadd.f32 %v632, %v641
        %v645 = vadd.f32 %v633, %v641
        %v646 = vadd.f32 %v634, %v641
        %v647 = vadd.f32 %v635, %v641
        %v648 = vadd.f32 %v636, %v641
        %v649 = vadd.f32 %v637, %v641
        %v650 = vadd.f32 %v638, %v641
        %v651 = vld [vmem:[%s4] sm:$0xff]
        %v652 = vld [vmem:[%s5] sm:$0x1]
        %v654 = vperm.slane %v652, 0
        %v657 = vsel %vm380, %v643, 0
        %v660 = vsel %vm380, %v644, 0
        %v663 = vsel %vm380, %v645, 0
        %v666 = vsel %vm380, %v646, 0
        %v669 = vsel %vm380, %v647, 0
        %v672 = vsel %vm380, %v648, 0
        %v675 = vsel %vm380, %v649, 0
        %v678 = vsel %vm380, %v650, 0
        %680 = vmatpush.msra.mxu0 0.0
        %681 = vmatpush.msra.mxu0 0.0
        %682 = vmatpush.msra.mxu0 0.0
        %683 = vmatpush.msra.mxu0 0.0
        %684 = vmatpush.msra.mxu0 0.0
        %685 = vmatpush.msra.mxu0 0.0
        %686 = vmatpush.msra.mxu0 0.0
        %687 = vmatpush.msra.mxu0 0.0
        %688 = vmatpush.msra.mxu0 0.0
        %689 = vmatpush.msra.mxu0 0.0
        %690 = vmatpush.msra.mxu0 0.0
        %691 = vmatpush.msra.mxu0 0.0
        %692 = vmatpush.msra.mxu0 0.0
        %693 = vmatpush.msra.mxu0 0.0
        %694 = vmatpush.msra.mxu0 0.0
        %695 = vmatpush.msra.mxu0 %v651
        %696 = vmatmul.f32.gmra.mxu0 %v657
        %v697 = vpop.f32.mrf.mxu0
        %v698 = vadd.f32 %v654, %v697
        %699 = vmatmul.f32.gmra.mxu0 %v660
        %v700 = vpop.f32.mrf.mxu0
        %v701 = vadd.f32 %v654, %v700
        %702 = vmatmul.f32.gmra.mxu0 %v663
        %v703 = vpop.f32.mrf.mxu0
        %v704 = vadd.f32 %v654, %v703
        %705 = vmatmul.f32.gmra.mxu0 %v666
        %v706 = vpop.f32.mrf.mxu0
        %v707 = vadd.f32 %v654, %v706
        %708 = vmatmul.f32.gmra.mxu0 %v669
        %v709 = vpop.f32.mrf.mxu0
        %v710 = vadd.f32 %v654, %v709
        %711 = vmatmul.f32.gmra.mxu0 %v672
        %v712 = vpop.f32.mrf.mxu0
        %v713 = vadd.f32 %v654, %v712
        %714 = vmatmul.f32.gmra.mxu0 %v675
        %v715 = vpop.f32.mrf.mxu0
        %v716 = vadd.f32 %v654, %v715
        %717 = vmatmul.f32.gmra.mxu0 %v678
        %v718 = vpop.f32.mrf.mxu0
        %v719 = vadd.f32 %v654, %v718
        %720 = vdwg.mxu0
        %v721 = vmax.f32 %v698, 0.0
        %v722 = vmax.f32 %v701, 0.0
        %v723 = vmax.f32 %v704, 0.0
        %v724 = vmax.f32 %v707, 0.0
        %v725 = vmax.f32 %v710, 0.0
        %v726 = vmax.f32 %v713, 0.0
        %v727 = vmax.f32 %v716, 0.0
        %v728 = vmax.f32 %v719, 0.0
        %vm729 = vcmask 261120
        %730 = vst.msk [vmem:[%s244] sm:$0xff] %vm729, %v721
        %731 = vst.msk [vmem:[%s244 + $0x8] sm:$0xff] %vm729, %v722
        %732 = vst.msk [vmem:[%s244 + $0x10] sm:$0xff] %vm729, %v723
        %733 = vst.msk [vmem:[%s244 + $0x18] sm:$0xff] %vm729, %v724
        %734 = vst.msk [vmem:[%s244 + $0x20] sm:$0xff] %vm729, %v725
        %735 = vst.msk [vmem:[%s244 + $0x28] sm:$0xff] %vm729, %v726
        %736 = vst.msk [vmem:[%s244 + $0x30] sm:$0xff] %vm729, %v727
        %737 = vst.msk [vmem:[%s244 + $0x38] sm:$0xff] %vm729, %v728
        %s738 = sand.u32 %s159, 1
        %s739 = scalar_lea.sflag [#allocation4], %s738
        %s740 = sand.u32 %s159, 1
        %s741 = smul.addr %s740, 64
        %s742 = scalar_lea.vmem [#allocation3], %s741
        // Predicated region
        $region45: #{inputlayer1_forward.1} parent=43 // pred_check
          %p743 = pneg %p169
        $region46: #{inputlayer1_forward.1} parent=43 // pred_check_branch
          %745 = sbr.rel (%p743) target = $region48
        $region47: #{inputlayer1_forward.1} parent=43 // pred_region
          %747 = vsyncadd %s739, 0
          %s748 = smul.addr %s20, 8
          %s749 = smul.addr %s748, 8
          %s750 = scalar_lea.hbm %s6, %s749
          %s751 = sshll.u32 %s742, 4
          %s752 = int_to_ptr.vmem [resolvable:$true] %s751
          %s753 = sshll.u32 %s750, 4
          %s754 = int_to_ptr.hbm [resolvable:$true] %s753
          %759 = dma.vmem_to_hbm [thread:$0]  %s752, 1024, %s754, %s739, 128, 128, 8
        $region48: #{inputlayer1_forward.1} parent=43 // pred_fallthru
          _
      $region44: #{inputlayer1_forward.1} parent=5 // pred_fallthru
        _
      %p760 = scmp.le.s32.totalorder 2, %s15
      // Predicated region
      $region49: #{inputlayer1_forward.1} parent=5 // pred_check
        %p761 = pneg %p760
      $region50: #{inputlayer1_forward.1} parent=5 // pred_check_branch
        %763 = sbr.rel (%p761) target = $region52
      $region51: #{inputlayer1_forward.1} parent=5 // pred_region
        %s764 = ssub.s32 %s15, 2
        // Predicated region
        $region53: #{inputlayer1_forward.1} parent=51 // pred_check
          %p765 = pneg %p175
        $region54: #{inputlayer1_forward.1} parent=51 // pred_check_branch
          %767 = sbr.rel (%p765) target = $region56
        $region55: #{inputlayer1_forward.1} parent=51 // pred_region
          %s768 = sand.u32 %s160, 1
          %s769 = scalar_lea.sflag [#allocation4], %s768
          %s770 = sand.u32 %s160, 1
          %s771 = smul.addr %s770, 64
          %s772 = scalar_lea.vmem [#allocation3], %s771
          %774 = dma.done %s769, 1024
        $region56: #{inputlayer1_forward.1} parent=51 // pred_fallthru
          _
      $region52: #{inputlayer1_forward.1} parent=5 // pred_fallthru
        _
    $region6: #{inputlayer1_forward.1} parent=1 // loop_footer
      %s19 = sadd.s32 1, %s15
    $region7: #{inputlayer1_forward.1} parent=1 // loop_footer_branch
      %14 = sbr.rel target = $region3
    $region8: #{inputlayer1_forward.1} parent=1 // loop_exit
      _
    %775 = vsyncpa [#allocation4], 1
    %s776 = scalar_lea.sflag [#allocation4], 1
    %777 = vsyncpa %s776, 1

</llo_original>
